<compile_context>
chip_gen: v7x
topology: tpu7x:2x2x1
jax: 0.10.0
libtpu: 0.0.40
codegen_flags: <defaults>
</compile_context>

<pallas_src>
import functools

import jax
import jax.numpy as jnp
from jax import lax
from jax.experimental import pallas as pl
from jax.experimental.pallas import tpu as pltpu

LN_EPS = 1e-5
INV_SQRT2 = 0.7071067811865476


def _feature_extractor_kernel(x_ref, w1_ref, p1_ref, w2_ref, p2_ref, o_ref, *,
                              approximate_gelu=False):
    # ---- Linear 1: bf16 operands -> f32 accumulation on the MXU ----
    xb = x_ref[...].astype(jnp.bfloat16)
    h = jnp.dot(xb, w1_ref[...], preferred_element_type=jnp.float32)

    p1 = p1_ref[...]                       # [3, 2H] f32: bias, ln_gamma, ln_beta
    h = h + p1[0:1, :]

    # ---- LayerNorm over last dim (2H), fused single pass ----
    mu = jnp.mean(h, axis=-1, keepdims=True)
    ms = jnp.mean(h * h, axis=-1, keepdims=True)
    var = jnp.maximum(ms - mu * mu, 0.0)
    h = (h - mu) * lax.rsqrt(var + LN_EPS)
    h = h * p1[1:2, :] + p1[2:3, :]

    # ---- GELU ----
    if approximate_gelu:
        h = jax.nn.gelu(h, approximate=True)            # tanh -> EUP slot
    else:
        h = 0.5 * h * (1.0 + lax.erf(h * INV_SQRT2))    # exact (torch default)

    # ---- Dropout(0.1): identity at inference ----
    # TODO(synk): training-mode dropout (pltpu.prng_*) not implemented.

    # ---- Linear 2: bf16 operands -> f32 accumulation ----
    y = jnp.dot(h.astype(jnp.bfloat16), w2_ref[...],
                preferred_element_type=jnp.float32)

    p2 = p2_ref[...]                       # [3, H] f32: bias, ln_gamma, ln_beta
    y = y + p2[0:1, :]

    # ---- LayerNorm over last dim (H), fused single pass ----
    mu2 = jnp.mean(y, axis=-1, keepdims=True)
    ms2 = jnp.mean(y * y, axis=-1, keepdims=True)
    var2 = jnp.maximum(ms2 - mu2 * mu2, 0.0)
    y = (y - mu2) * lax.rsqrt(var2 + LN_EPS)
    y = y * p2[1:2, :] + p2[2:3, :]

    o_ref[...] = y.astype(o_ref.dtype)


def _round_up(v, m):
    return (v + m - 1) // m * m


def _pick_tile_and_vmem(M, D_in, H2, H):
    """Per-generation row-tile size and VMEM limit."""
    try:
        vmem_cap = int(pltpu.get_tpu_info().vmem_capacity_bytes)
    except Exception:
        vmem_cap = 64 << 20            # conservative fallback (v7x per-core)

    if vmem_cap >= (100 << 20):        # v5e / v6e: 128 MiB VMEM
        vmem_limit = 100 << 20
        tm_max = 512
    else:                              # v7x: 64 MiB VMEM
        vmem_limit = 48 << 20
        tm_max = 256

    TM = min(tm_max, _round_up(M, 16))
    TM = max(16, _round_up(TM, 16))    # bf16 sublane packing -> multiple of 16

    def est_bytes(tm):
        # resident bf16 weights (double-buffered by default) + f32 param packs
        resident = 2 * 2 * (D_in * H2 + H2 * H) + 2 * 4 * 3 * (H2 + H)
        # double-buffered x (f32) / out tiles + ~3 live [TM, 2H] f32 temps
        per_step = 2 * 4 * tm * D_in + 2 * 4 * tm * H + 3 * 4 * tm * H2
        return resident + per_step

    while TM > 16 and est_bytes(TM) > int(0.85 * vmem_limit):
        TM = max(16, TM // 2)

    # TODO(synk): if resident bf16 weights alone exceed ~half of vmem_limit
    # (large D_in / H, especially on v7x), stream w1/w2 in K/N tiles (second
    # grid axis or pltpu.emit_pipeline) and single-buffer the resident specs
    # (pipeline_mode=pl.Buffered(1)) instead of keeping them fully resident.
    return TM, vmem_limit


def feature_extractor(x, params, *, approximate_gelu=False,
                      out_dtype=jnp.float32):
    """x: [B, S, D_in] float32 -> [B, S, H] out_dtype.

    params = (w1_bf16 [D_in, 2H], p1_f32 [3, 2H], w2_bf16 [2H, H], p2_f32 [3, H])
    (rows of p*: 0=linear bias, 1=LN gamma, 2=LN beta) — see pack_params().
    """
    B, S, D_in = x.shape
    w1, p1, w2, p2 = params
    H2 = w1.shape[1]
    H = w2.shape[1]
    M = B * S

    TM, vmem_limit = _pick_tile_and_vmem(M, D_in, H2, H)
    grid = (pl.cdiv(M, TM),)

    x2d = x.reshape(M, D_in)            # f32; cast to bf16 inside the kernel

    kernel = functools.partial(_feature_extractor_kernel,
                               approximate_gelu=approximate_gelu)

    row_spec = lambda shape: pl.BlockSpec(shape, lambda i: (i, 0))   # tiled on M
    res_spec = lambda shape: pl.BlockSpec(shape, lambda i: (0, 0))   # VMEM-resident

    out = pl.pallas_call(
        kernel,
        out_shape=jax.ShapeDtypeStruct((M, H), out_dtype),
        grid=grid,
        in_specs=[
            row_spec((TM, D_in)),
            res_spec((D_in, H2)),
            res_spec((3, H2)),
            res_spec((H2, H)),
            res_spec((3, H)),
        ],
        out_specs=row_spec((TM, H)),
        compiler_params=pltpu.CompilerParams(
            dimension_semantics=("parallel",),
            vmem_limit_bytes=vmem_limit,
        ),
    )(x2d, w1, p1, w2, p2)

    return out.reshape(B, S, H)


def pack_params(w1, b1, g1, be1, w2, b2, g2, be2):
    """One-time conversion (do this OUTSIDE the jitted forward):
    bf16 weight matrices + packed [3, X] f32 bias/LN-affine arrays."""
    p1 = jnp.stack([b1, g1, be1]).astype(jnp.float32)   # [3, 2H]
    p2 = jnp.stack([b2, g2, be2]).astype(jnp.float32)   # [3, H]
    return (w1.astype(jnp.bfloat16), p1, w2.astype(jnp.bfloat16), p2)


def init_params(key, input_size, hidden_size):
    """Deterministic synthetic parameters (shapes match the torch module).
    Linear weights stored as [in, out] (torch weight transposed)."""
    h2 = hidden_size * 2
    k1, k2, k3, k4 = jax.random.split(key, 4)
    w1 = jax.random.normal(k1, (input_size, h2), jnp.float32) * 0.05
    b1 = jax.random.normal(k2, (h2,), jnp.float32) * 0.01
    g1 = jnp.ones((h2,), jnp.float32)
    be1 = jnp.zeros((h2,), jnp.float32)
    w2 = jax.random.normal(k3, (h2, hidden_size), jnp.float32) * 0.05
    b2 = jax.random.normal(k4, (hidden_size,), jnp.float32) * 0.01
    g2 = jnp.ones((hidden_size,), jnp.float32)
    be2 = jnp.zeros((hidden_size,), jnp.float32)
    return (w1, b1, g1, be1, w2, b2, g2, be2)


def _layernorm(v, g, b):
    mu = v.mean(-1, keepdims=True)
    var = jnp.mean(jnp.square(v - mu), axis=-1, keepdims=True)
    return (v - mu) * lax.rsqrt(var + LN_EPS) * g + b


if __name__ == "__main__":
    key = jax.random.PRNGKey(0)
    batch, seq, input_size, hidden_size = 2, 8, 32, 32

    kx, kp = jax.random.split(key)
    x = jax.random.normal(kx, (batch, seq, input_size), jnp.float32)
    raw = init_params(kp, input_size, hidden_size)
    params = pack_params(*raw)          # one-time bf16 cast + packing (not in jit)

    fe = jax.jit(feature_extractor)
    y = jax.block_until_ready(fe(x, params))
    assert y.shape == (batch, seq, hidden_size)

    w1, b1, g1, be1, w2, b2, g2, be2 = raw
    x2d = x.reshape(-1, input_size)

    # Reference 1: same bf16-operand / f32-accumulate math as the kernel.
    h = jnp.dot(x2d.astype(jnp.bfloat16), w1.astype(jnp.bfloat16),
                preferred_element_type=jnp.float32) + b1
    h = _layernorm(h, g1, be1)
    h = 0.5 * h * (1.0 + lax.erf(h * INV_SQRT2))
    r = jnp.dot(h.astype(jnp.bfloat16), w2.astype(jnp.bfloat16),
                preferred_element_type=jnp.float32) + b2
    r = _layernorm(r, g2, be2).reshape(batch, seq, hidden_size)
    assert jnp.allclose(y, r, atol=2e-3, rtol=2e-3), "mismatch vs bf16 reference"

    # Reference 2: pure f32 (original module semantics), loose tolerance for
    # the bf16 matmul operands.
    hf = x2d @ w1 + b1
    hf = _layernorm(hf, g1, be1)
    hf = 0.5 * hf * (1.0 + lax.erf(hf * INV_SQRT2))
    rf = hf @ w2 + b2
    rf = _layernorm(rf, g2, be2).reshape(batch, seq, hidden_size)
    assert jnp.allclose(y, rf, atol=5e-2, rtol=5e-2), "mismatch vs f32 reference"

    print("KERNEL_OK")
</pallas_src>

<mosaic_0001>
module attributes {stable_mosaic.version = 11 : i64} {
  func.func @_feature_extractor_kernel(%arg0: i32, %arg1: memref<16x32xf32, #tpu.memory_space<vmem>>, %arg2: memref<32x64xbf16, #tpu.memory_space<vmem>>, %arg3: memref<3x64xf32, #tpu.memory_space<vmem>>, %arg4: memref<64x32xbf16, #tpu.memory_space<vmem>>, %arg5: memref<3x32xf32, #tpu.memory_space<vmem>>, %arg6: memref<16x32xf32, #tpu.memory_space<vmem>>) attributes {dimension_semantics = [#tpu.dimension_semantics<parallel>], iteration_bounds = array<i64: 1>, scalar_prefetch = 0 : i64, scratch_operands = 0 : i64, tpu.core_type = #tpu.core_type<tc>, window_params = [{transform_indices = @transform_0, window_bounds = array<i64: 16, 32>}, {pipeline_mode = #tpu.pipeline_mode<synchronous>, transform_indices = @transform_1, window_bounds = array<i64: 32, 64>}, {pipeline_mode = #tpu.pipeline_mode<synchronous>, transform_indices = @transform_2, window_bounds = array<i64: 3, 64>}, {pipeline_mode = #tpu.pipeline_mode<synchronous>, transform_indices = @transform_3, window_bounds = array<i64: 64, 32>}, {pipeline_mode = #tpu.pipeline_mode<synchronous>, transform_indices = @transform_4, window_bounds = array<i64: 3, 32>}, {transform_indices = @transform_5, window_bounds = array<i64: 16, 32>}]} {
    %c0 = arith.constant 0 : index
    %c0_0 = arith.constant 0 : index
    %0 = vector.load %arg1[%c0, %c0_0] : memref<16x32xf32, #tpu.memory_space<vmem>>, vector<16x32xf32>
    %1 = arith.truncf %0 : vector<16x32xf32> to vector<16x32xbf16>
    %c0_1 = arith.constant 0 : index
    %c0_2 = arith.constant 0 : index
    %2 = vector.load %arg2[%c0_1, %c0_2] : memref<32x64xbf16, #tpu.memory_space<vmem>>, vector<32x64xbf16>
    %cst = arith.constant dense<0.000000e+00> : vector<16x64xf32>
    %3 = tpu.matmul %1, %2, %cst {dimension_numbers = #tpu.dot_dimension_numbers<[1], [0], [0], [1], [0, 0, 1, 1], [], []>} : vector<16x32xbf16>, vector<32x64xbf16>, vector<16x64xf32> -> vector<16x64xf32>
    %c0_3 = arith.constant 0 : index
    %c0_4 = arith.constant 0 : index
    %4 = vector.load %arg3[%c0_3, %c0_4] : memref<3x64xf32, #tpu.memory_space<vmem>>, vector<3x64xf32>
    %5 = vector.extract_strided_slice %4 {offsets = [0, 0], sizes = [1, 64], strides = [1, 1]} : vector<3x64xf32> to vector<1x64xf32>
    %6 = vector.broadcast %5 : vector<1x64xf32> to vector<16x64xf32>
    %7 = arith.addf %3, %6 : vector<16x64xf32>
    %cst_5 = arith.constant dense<0.000000e+00> : vector<16xf32>
    %8 = vector.multi_reduction <add>, %7, %cst_5 [1] : vector<16x64xf32> to vector<16xf32>
    %9 = vector.shape_cast %8 : vector<16xf32> to vector<16x1xf32>
    %cst_6 = arith.constant 6.400000e+01 : f32
    %10 = vector.broadcast %cst_6 : f32 to vector<16x1xf32>
    %11 = arith.divf %9, %10 : vector<16x1xf32>
    %12 = arith.mulf %7, %7 : vector<16x64xf32>
    %cst_7 = arith.constant dense<0.000000e+00> : vector<16xf32>
    %13 = vector.multi_reduction <add>, %12, %cst_7 [1] : vector<16x64xf32> to vector<16xf32>
    %14 = vector.shape_cast %13 : vector<16xf32> to vector<16x1xf32>
    %cst_8 = arith.constant 6.400000e+01 : f32
    %15 = vector.broadcast %cst_8 : f32 to vector<16x1xf32>
    %16 = arith.divf %14, %15 : vector<16x1xf32>
    %17 = arith.mulf %11, %11 : vector<16x1xf32>
    %18 = arith.subf %16, %17 : vector<16x1xf32>
    %cst_9 = arith.constant 0.000000e+00 : f32
    %19 = vector.broadcast %cst_9 : f32 to vector<16x1xf32>
    %20 = arith.maximumf %18, %19 : vector<16x1xf32>
    %21 = vector.broadcast %11 : vector<16x1xf32> to vector<16x64xf32>
    %22 = arith.subf %7, %21 : vector<16x64xf32>
    %cst_10 = arith.constant 9.99999974E-6 : f32
    %23 = vector.broadcast %cst_10 : f32 to vector<16x1xf32>
    %24 = arith.addf %20, %23 : vector<16x1xf32>
    %25 = math.rsqrt %24 : vector<16x1xf32>
    %26 = vector.broadcast %25 : vector<16x1xf32> to vector<16x64xf32>
    %27 = arith.mulf %22, %26 : vector<16x64xf32>
    %28 = vector.extract_strided_slice %4 {offsets = [1, 0], sizes = [1, 64], strides = [1, 1]} : vector<3x64xf32> to vector<1x64xf32>
    %29 = vector.broadcast %28 : vector<1x64xf32> to vector<16x64xf32>
    %30 = arith.mulf %27, %29 : vector<16x64xf32>
    %31 = vector.extract_strided_slice %4 {offsets = [2, 0], sizes = [1, 64], strides = [1, 1]} : vector<3x64xf32> to vector<1x64xf32>
    %32 = vector.broadcast %31 : vector<1x64xf32> to vector<16x64xf32>
    %33 = arith.addf %30, %32 : vector<16x64xf32>
    %cst_11 = arith.constant 5.000000e-01 : f32
    %34 = vector.broadcast %cst_11 : f32 to vector<16x64xf32>
    %35 = arith.mulf %34, %33 : vector<16x64xf32>
    %cst_12 = arith.constant 0.707106769 : f32
    %36 = vector.broadcast %cst_12 : f32 to vector<16x64xf32>
    %37 = arith.mulf %33, %36 : vector<16x64xf32>
    %38 = math.erf %37 : vector<16x64xf32>
    %cst_13 = arith.constant 1.000000e+00 : f32
    %39 = vector.broadcast %cst_13 : f32 to vector<16x64xf32>
    %40 = arith.addf %39, %38 : vector<16x64xf32>
    %41 = arith.mulf %35, %40 : vector<16x64xf32>
    %42 = arith.truncf %41 : vector<16x64xf32> to vector<16x64xbf16>
    %c0_14 = arith.constant 0 : index
    %c0_15 = arith.constant 0 : index
    %43 = vector.load %arg4[%c0_14, %c0_15] : memref<64x32xbf16, #tpu.memory_space<vmem>>, vector<64x32xbf16>
    %cst_16 = arith.constant dense<0.000000e+00> : vector<16x32xf32>
    %44 = tpu.matmul %42, %43, %cst_16 {dimension_numbers = #tpu.dot_dimension_numbers<[1], [0], [0], [1], [0, 0, 1, 1], [], []>} : vector<16x64xbf16>, vector<64x32xbf16>, vector<16x32xf32> -> vector<16x32xf32>
    %c0_17 = arith.constant 0 : index
    %c0_18 = arith.constant 0 : index
    %45 = vector.load %arg5[%c0_17, %c0_18] : memref<3x32xf32, #tpu.memory_space<vmem>>, vector<3x32xf32>
    %46 = vector.extract_strided_slice %45 {offsets = [0, 0], sizes = [1, 32], strides = [1, 1]} : vector<3x32xf32> to vector<1x32xf32>
    %47 = vector.broadcast %46 : vector<1x32xf32> to vector<16x32xf32>
    %48 = arith.addf %44, %47 : vector<16x32xf32>
    %cst_19 = arith.constant dense<0.000000e+00> : vector<16xf32>
    %49 = vector.multi_reduction <add>, %48, %cst_19 [1] : vector<16x32xf32> to vector<16xf32>
    %50 = vector.shape_cast %49 : vector<16xf32> to vector<16x1xf32>
    %cst_20 = arith.constant 3.200000e+01 : f32
    %51 = vector.broadcast %cst_20 : f32 to vector<16x1xf32>
    %52 = arith.divf %50, %51 : vector<16x1xf32>
    %53 = arith.mulf %48, %48 : vector<16x32xf32>
    %cst_21 = arith.constant dense<0.000000e+00> : vector<16xf32>
    %54 = vector.multi_reduction <add>, %53, %cst_21 [1] : vector<16x32xf32> to vector<16xf32>
    %55 = vector.shape_cast %54 : vector<16xf32> to vector<16x1xf32>
    %cst_22 = arith.constant 3.200000e+01 : f32
    %56 = vector.broadcast %cst_22 : f32 to vector<16x1xf32>
    %57 = arith.divf %55, %56 : vector<16x1xf32>
    %58 = arith.mulf %52, %52 : vector<16x1xf32>
    %59 = arith.subf %57, %58 : vector<16x1xf32>
    %cst_23 = arith.constant 0.000000e+00 : f32
    %60 = vector.broadcast %cst_23 : f32 to vector<16x1xf32>
    %61 = arith.maximumf %59, %60 : vector<16x1xf32>
    %62 = vector.broadcast %52 : vector<16x1xf32> to vector<16x32xf32>
    %63 = arith.subf %48, %62 : vector<16x32xf32>
    %cst_24 = arith.constant 9.99999974E-6 : f32
    %64 = vector.broadcast %cst_24 : f32 to vector<16x1xf32>
    %65 = arith.addf %61, %64 : vector<16x1xf32>
    %66 = math.rsqrt %65 : vector<16x1xf32>
    %67 = vector.broadcast %66 : vector<16x1xf32> to vector<16x32xf32>
    %68 = arith.mulf %63, %67 : vector<16x32xf32>
    %69 = vector.extract_strided_slice %45 {offsets = [1, 0], sizes = [1, 32], strides = [1, 1]} : vector<3x32xf32> to vector<1x32xf32>
    %70 = vector.broadcast %69 : vector<1x32xf32> to vector<16x32xf32>
    %71 = arith.mulf %68, %70 : vector<16x32xf32>
    %72 = vector.extract_strided_slice %45 {offsets = [2, 0], sizes = [1, 32], strides = [1, 1]} : vector<3x32xf32> to vector<1x32xf32>
    %73 = vector.broadcast %72 : vector<1x32xf32> to vector<16x32xf32>
    %74 = arith.addf %71, %73 : vector<16x32xf32>
    %c0_25 = arith.constant 0 : index
    %c0_26 = arith.constant 0 : index
    %75 = vector.load %arg6[%c0_25, %c0_26] : memref<16x32xf32, #tpu.memory_space<vmem>>, vector<16x32xf32>
    tpu.vector_store %arg6[%c0_25, %c0_26], %74 {strides = array<i32>} : memref<16x32xf32, #tpu.memory_space<vmem>>, vector<16x32xf32>,
    return
  }
  func.func @transform_0(%arg0: i32) -> (i32, i32) {
    %c0_i32 = arith.constant 0 : i32
    %c0_i32_0 = arith.constant 0 : i32
    return %arg0, %c0_i32 : i32, i32
  }
  func.func @transform_1(%arg0: i32) -> (i32, i32) {
    %c0_i32 = arith.constant 0 : i32
    %c0_i32_0 = arith.constant 0 : i32
    %c0_i32_1 = arith.constant 0 : i32
    return %c0_i32, %c0_i32_0 : i32, i32
  }
  func.func @transform_2(%arg0: i32) -> (i32, i32) {
    %c0_i32 = arith.constant 0 : i32
    %c0_i32_0 = arith.constant 0 : i32
    %c0_i32_1 = arith.constant 0 : i32
    return %c0_i32, %c0_i32_0 : i32, i32
  }
  func.func @transform_3(%arg0: i32) -> (i32, i32) {
    %c0_i32 = arith.constant 0 : i32
    %c0_i32_0 = arith.constant 0 : i32
    %c0_i32_1 = arith.constant 0 : i32
    return %c0_i32, %c0_i32_0 : i32, i32
  }
  func.func @transform_4(%arg0: i32) -> (i32, i32) {
    %c0_i32 = arith.constant 0 : i32
    %c0_i32_0 = arith.constant 0 : i32
    %c0_i32_1 = arith.constant 0 : i32
    return %c0_i32, %c0_i32_0 : i32, i32
  }
  func.func @transform_5(%arg0: i32) -> (i32, i32) {
    %c0_i32 = arith.constant 0 : i32
    %c0_i32_0 = arith.constant 0 : i32
    return %arg0, %c0_i32 : i32, i32
  }
}

</mosaic_0001>

<llo_original>
// kernel: feature_extractor.1
$region0: #{feature_extractor.1}
  #allocation0 [shape = 'u32[]', space=smem, size = 0x4, offset = 0x4, fixed_abs, tag = 'smem constant byte address 0x4 - core index']
  #allocation1 [shape = 'u32[144,128]{1,0:T(1,128)}', space=vmem, size = 0x12000, scoped, tag = 'internal scratch']
  %s0 = inlined_call_operand.vmem [shape: f32[16,32], index: 0, kind: input, shape index: {}]
  %s1 = inlined_call_operand.vmem [shape: bf16[32,64], index: 1, kind: input, shape index: {}]
  %s2 = inlined_call_operand.vmem [shape: f32[3,64], index: 2, kind: input, shape index: {}]
  %s3 = inlined_call_operand.vmem [shape: bf16[64,32], index: 3, kind: input, shape index: {}]
  %s4 = inlined_call_operand.vmem [shape: f32[3,32], index: 4, kind: input, shape index: {}]
  %s5 = inlined_call_operand.hbm [shape: f32[16,32], index: 5, kind: output, shape index: {}]
  %s6 = sld [smem:[#allocation0]]
  $region30: #{feature_extractor.1} parent=0
    _
  %s8 = ssub.s32 1, %s6
  %s9 = scalar_select 0, %s8, %s6
  $region1: #{feature_extractor.1} parent=0
    #allocation2 [shape = 'u8[8192]{0}', space=vmem, size = 0x2000, scoped, tag = 'output window, operand 0, single buffered']
    #allocation3 [shape = 's32[1]{0}', space=sflag, size = 0x4, scoped, tag = 'scoped memory for feature_extractor.1']
    %10 = vsyncpa [#allocation3], 0
    // Predicated region
    $region2: #{feature_extractor.1} parent=1 // pred_check
      _
    $region3: #{feature_extractor.1} parent=1 // pred_check_branch
      %12 = sbr.rel (0) target = $region5
    $region4: #{feature_extractor.1} parent=1 // pred_region
      _
    $region5: #{feature_extractor.1} parent=1 // pred_fallthru
      _
    // Predicated region
    $region6: #{feature_extractor.1} parent=1 // pred_check
      _
    $region7: #{feature_extractor.1} parent=1 // pred_check_branch
      %14 = sbr.rel (0) target = $region9
    $region8: #{feature_extractor.1} parent=1 // pred_region
      _
    $region9: #{feature_extractor.1} parent=1 // pred_fallthru
      _
    // Predicated region
    $region10: #{feature_extractor.1} parent=1 // pred_check
      _
    $region11: #{feature_extractor.1} parent=1 // pred_check_branch
      %16 = sbr.rel (0) target = $region13
    $region12: #{feature_extractor.1} parent=1 // pred_region
      _
    $region13: #{feature_extractor.1} parent=1 // pred_fallthru
      _
    // Predicated region
    $region14: #{feature_extractor.1} parent=1 // pred_check
      _
    $region15: #{feature_extractor.1} parent=1 // pred_check_branch
      %18 = sbr.rel (0) target = $region17
    $region16: #{feature_extractor.1} parent=1 // pred_region
      _
    $region17: #{feature_extractor.1} parent=1 // pred_fallthru
      _
    // Predicated region
    $region18: #{feature_extractor.1} parent=1 // pred_check
      _
    $region19: #{feature_extractor.1} parent=1 // pred_check_branch
      %20 = sbr.rel (0) target = $region21
    $region20: #{feature_extractor.1} parent=1 // pred_region
      _
    $region21: #{feature_extractor.1} parent=1 // pred_fallthru
      _
    %v22 = vld [vmem:[%s0] sm:$0xff]
    %v23 = vld [vmem:[%s0 + $0x8] sm:$0xff]
    %v24 = vpack.c.bf16 %v23, %v22
    %v25 = vld [vmem:[%s1] sm:$0xf]
    %v26 = vld [vmem:[%s1 + $0x4] sm:$0xf]
    %v27 = vld [vmem:[%s1 + $0x8] sm:$0xf]
    %v28 = vld [vmem:[%s1 + $0xc] sm:$0xf]
    %v29 = vld [vmem:[%s2] sm:$0x7]
    %v30 = vlaneseq
    %v31 = vshrl.u32 %v30, 7
    %v32 = vsub.s32 0, %v31
    %v33 = vrot.slane %v29, %v32
    %v38 = vunpack.c.l.b16 %v25
    %v39 = vunpack.c.l.b16 %v26
    %v40 = vunpack.c.l.b16 %v27
    %v41 = vunpack.c.l.b16 %v28
    %v42 = vpack.c.b16 %v39, %v38
    %v43 = vpack.c.b16 %v41, %v40
    %vm46 = vcmask 261120
    %v48 = vsel %vm46, %v24, 0
    %50 = vmatprep.subr.bf16.mxu0 0
    %51 = vmatpush1.bf16.msra.mxu0 %v42
    %52 = vmatprep.subr.bf16.mxu0 0
    %53 = vmatpush1.bf16.msra.mxu0 %v43
    %54 = vmatprep.subr.bf16.mxu0 0
    %55 = vmatpush1.bf16.msra.mxu0 0
    %56 = vmatprep.subr.bf16.mxu0 0
    %57 = vmatpush1.bf16.msra.mxu0 0
    %58 = vmatprep.subr.bf16.mxu0 0
    %59 = vmatpush1.bf16.msra.mxu0 0
    %60 = vmatprep.subr.bf16.mxu0 0
    %61 = vmatpush1.bf16.msra.mxu0 0
    %62 = vmatprep.subr.bf16.mxu0 0
    %63 = vmatpush1.bf16.msra.mxu0 0
    %64 = vmatprep.subr.bf16.mxu0 0
    %65 = vmatpush1.bf16.msra.mxu0 0
    %66 = vmatprep.subr.bf16.mxu0 0
    %67 = vmatpush1.bf16.msra.mxu0 0
    %68 = vmatprep.subr.bf16.mxu0 0
    %69 = vmatpush1.bf16.msra.mxu0 0
    %70 = vmatprep.subr.bf16.mxu0 0
    %71 = vmatpush1.bf16.msra.mxu0 0
    %72 = vmatprep.subr.bf16.mxu0 0
    %73 = vmatpush1.bf16.msra.mxu0 0
    %74 = vmatprep.subr.bf16.mxu0 0
    %75 = vmatpush1.bf16.msra.mxu0 0
    %76 = vmatprep.subr.bf16.mxu0 0
    %77 = vmatpush1.bf16.msra.mxu0 0
    %78 = vmatprep.subr.bf16.mxu0 0
    %79 = vmatpush1.bf16.msra.mxu0 0
    %80 = vmatprep.subr.bf16.mxu0 0
    %81 = vmatpush1.bf16.msra.mxu0 0
    %82 = vmatprep.mubr.bf16.mxu0 0
    %83 = vmatmul.mubr.bf16.gmra.mrb[0].mxu0 %v48
    %v84 = vpop.f32.mrb[0].mxu0
    %v85 = vadd.f32 %v33, %v84
    %v86 = vpop.f32.mrb[0].mxu0
    %v87 = vpop.f32.mrb[0].mxu0
    %v88 = vadd.f32 %v33, %v87
    %v89 = vpop.f32.mrb[0].mxu0
    %90 = vdwg.mxu0
    %vm91 = vcmask 523264
    %v92 = vsel %vm91, %v85, 0.0
    %93 = vadd.xlane.f32.xlu0 %v92
    %v94 = vpop.xlane.xlu0 %93
    %v95 = vsel %vm91, %v88, 0.0
    %96 = vadd.xlane.f32.xlu0 %v95
    %v97 = vpop.xlane.xlu0 %96
    %v98 = vrcp.pop 64.0
    %v99 = vmul.f32 %v94, %v98
    %v100 = vmul.f32 %v97, %v98
    %v101 = vmul.f32 %v85, %v85
    %v102 = vmul.f32 %v88, %v88
    %v103 = vsel %vm91, %v101, 0.0
    %104 = vadd.xlane.f32.xlu0 %v103
    %v105 = vpop.xlane.xlu0 %104
    %v106 = vsel %vm91, %v102, 0.0
    %107 = vadd.xlane.f32.xlu0 %v106
    %v108 = vpop.xlane.xlu0 %107
    %v109 = vmul.f32 %v105, %v98
    %v110 = vmul.f32 %v108, %v98
    %v111 = vmul.f32 %v99, %v99
    %v112 = vmul.f32 %v100, %v100
    %v113 = vsub.f32 %v109, %v111
    %v114 = vsub.f32 %v110, %v112
    %v115 = vmax.f32 %v113, 0.0
    %v116 = vmax.f32 %v114, 0.0
    %v117 = vsub.f32 %v85, %v99
    %v118 = vsub.f32 %v88, %v100
    %v119 = vadd.f32 %v115, 1e-05
    %v120 = vadd.f32 %v116, 1e-05
    %v121 = vrsqrt.pop %v119
    %v122 = vrsqrt.pop %v120
    %v123 = vmul.f32 %v117, %v121
    %v124 = vmul.f32 %v118, %v122
    %v125 = vlaneseq
    %v126 = vshrl.u32 %v125, 7
    %v127 = vsub.s32 1, %v126
    %v128 = vrot.slane %v29, %v127
    %v129 = vmul.f32 %v123, %v128
    %v130 = vmul.f32 %v124, %v128
    %v131 = vlaneseq
    %v132 = vshrl.u32 %v131, 7
    %v133 = vsub.s32 2, %v132
    %v134 = vrot.slane %v29, %v133
    %v135 = vadd.f32 %v129, %v134
    %v136 = vadd.f32 %v130, %v134
    %v137 = vmul.f32 %v135, 0.5
    %v138 = vmul.f32 %v136, 0.5
    %v139 = vmul.f32 %v135, 0.70710677
    %v140 = vmul.f32 %v136, 0.70710677
    %v141 = verf.f32.pop %v139
    %v142 = verf.f32.pop %v140
    %v143 = vadd.f32 %v141, 1.0
    %v144 = vadd.f32 %v142, 1.0
    %v145 = vmul.f32 %v137, %v143
    %v146 = vmul.f32 %v138, %v144
    %v147 = vpack.c.bf16 %v146, %v145
    %v148 = vld [vmem:[%s3] sm:$0xf]
    %v149 = vld [vmem:[%s3 + $0x4] sm:$0xf]
    %v150 = vld [vmem:[%s3 + $0x8] sm:$0xf]
    %v151 = vld [vmem:[%s3 + $0xc] sm:$0xf]
    %v152 = vld [vmem:[%s3 + $0x10] sm:$0xf]
    %v153 = vld [vmem:[%s3 + $0x14] sm:$0xf]
    %v154 = vld [vmem:[%s3 + $0x18] sm:$0xf]
    %v155 = vld [vmem:[%s3 + $0x1c] sm:$0xf]
    %v156 = vld [vmem:[%s4] sm:$0x7]
    %v157 = vlaneseq
    %v158 = vshrl.u32 %v157, 7
    %v159 = vsub.s32 0, %v158
    %v160 = vrot.slane %v156, %v159
    %v169 = vunpack.c.l.b16 %v148
    %v170 = vunpack.c.l.b16 %v149
    %v171 = vunpack.c.l.b16 %v150
    %v172 = vunpack.c.l.b16 %v151
    %v173 = vunpack.c.l.b16 %v152
    %v174 = vunpack.c.l.b16 %v153
    %v175 = vunpack.c.l.b16 %v154
    %v176 = vunpack.c.l.b16 %v155
    %v177 = vpack.c.b16 %v170, %v169
    %v178 = vpack.c.b16 %v172, %v171
    %v179 = vpack.c.b16 %v174, %v173
    %v180 = vpack.c.b16 %v176, %v175
    %v186 = vsel %vm91, %v147, 0
    %188 = vmatprep.subr.bf16.mxu0 0
    %189 = vmatpush1.bf16.msra.mxu0 %v177
    %190 = vmatprep.subr.bf16.mxu0 0
    %191 = vmatpush1.bf16.msra.mxu0 %v178
    %192 = vmatprep.subr.bf16.mxu0 0
    %193 = vmatpush1.bf16.msra.mxu0 %v179
    %194 = vmatprep.subr.bf16.mxu0 0
    %195 = vmatpush1.bf16.msra.mxu0 %v180
    %196 = vmatprep.subr.bf16.mxu0 0
    %197 = vmatpush1.bf16.msra.mxu0 0
    %198 = vmatprep.subr.bf16.mxu0 0
    %199 = vmatpush1.bf16.msra.mxu0 0
    %200 = vmatprep.subr.bf16.mxu0 0
    %201 = vmatpush1.bf16.msra.mxu0 0
    %202 = vmatprep.subr.bf16.mxu0 0
    %203 = vmatpush1.bf16.msra.mxu0 0
    %204 = vmatprep.subr.bf16.mxu0 0
    %205 = vmatpush1.bf16.msra.mxu0 0
    %206 = vmatprep.subr.bf16.mxu0 0
    %207 = vmatpush1.bf16.msra.mxu0 0
    %208 = vmatprep.subr.bf16.mxu0 0
    %209 = vmatpush1.bf16.msra.mxu0 0
    %210 = vmatprep.subr.bf16.mxu0 0
    %211 = vmatpush1.bf16.msra.mxu0 0
    %212 = vmatprep.subr.bf16.mxu0 0
    %213 = vmatpush1.bf16.msra.mxu0 0
    %214 = vmatprep.subr.bf16.mxu0 0
    %215 = vmatpush1.bf16.msra.mxu0 0
    %216 = vmatprep.subr.bf16.mxu0 0
    %217 = vmatpush1.bf16.msra.mxu0 0
    %218 = vmatprep.subr.bf16.mxu0 0
    %219 = vmatpush1.bf16.msra.mxu0 0
    %220 = vmatprep.mubr.bf16.mxu0 0
    %221 = vmatmul.mubr.bf16.gmra.mrb[0].mxu0 %v186
    %v222 = vpop.f32.mrb[0].mxu0
    %v223 = vadd.f32 %v160, %v222
    %v224 = vpop.f32.mrb[0].mxu0
    %v225 = vpop.f32.mrb[0].mxu0
    %v226 = vadd.f32 %v160, %v225
    %v227 = vpop.f32.mrb[0].mxu0
    %228 = vdwg.mxu0
    %v229 = vsel %vm46, %v223, 0.0
    %230 = vadd.xlane.f32.xlu0 %v229
    %v231 = vpop.xlane.xlu0 %230
    %v232 = vsel %vm46, %v226, 0.0
    %233 = vadd.xlane.f32.xlu0 %v232
    %v234 = vpop.xlane.xlu0 %233
    %v235 = vrcp.pop 32.0
    %v236 = vmul.f32 %v231, %v235
    %v237 = vmul.f32 %v234, %v235
    %v238 = vmul.f32 %v223, %v223
    %v239 = vmul.f32 %v226, %v226
    %v240 = vsel %vm46, %v238, 0.0
    %241 = vadd.xlane.f32.xlu0 %v240
    %v242 = vpop.xlane.xlu0 %241
    %v243 = vsel %vm46, %v239, 0.0
    %244 = vadd.xlane.f32.xlu0 %v243
    %v245 = vpop.xlane.xlu0 %244
    %v246 = vmul.f32 %v242, %v235
    %v247 = vmul.f32 %v245, %v235
    %v248 = vmul.f32 %v236, %v236
    %v249 = vmul.f32 %v237, %v237
    %v250 = vsub.f32 %v246, %v248
    %v251 = vsub.f32 %v247, %v249
    %v252 = vmax.f32 %v250, 0.0
    %v253 = vmax.f32 %v251, 0.0
    %v254 = vsub.f32 %v223, %v236
    %v255 = vsub.f32 %v226, %v237
    %v256 = vadd.f32 %v252, 1e-05
    %v257 = vadd.f32 %v253, 1e-05
    %v258 = vrsqrt.pop %v256
    %v259 = vrsqrt.pop %v257
    %v260 = vmul.f32 %v254, %v258
    %v261 = vmul.f32 %v255, %v259
    %v262 = vlaneseq
    %v263 = vshrl.u32 %v262, 7
    %v264 = vsub.s32 1, %v263
    %v265 = vrot.slane %v156, %v264
    %v266 = vmul.f32 %v260, %v265
    %v267 = vmul.f32 %v261, %v265
    %v268 = vlaneseq
    %v269 = vshrl.u32 %v268, 7
    %v270 = vsub.s32 2, %v269
    %v271 = vrot.slane %v156, %v270
    %v272 = vadd.f32 %v266, %v271
    %v273 = vadd.f32 %v267, %v271
    %274 = vst.msk [vmem:[#allocation2] sm:$0xff] %vm46, %v272
    %275 = vst.msk [vmem:[#allocation2 + $0x8] sm:$0xff] %vm46, %v273
    // Predicated region
    $region22: #{feature_extractor.1} parent=1 // pred_check
      _
    $region23: #{feature_extractor.1} parent=1 // pred_check_branch
      %277 = sbr.rel (0) target = $region25
    $region24: #{feature_extractor.1} parent=1 // pred_region
      %s279 = ssub.s32 256, 256
      %280 = vsyncadd [#allocation3], %s279
      %s281 = sshll.u32 [#allocation2], 4
      %s282 = int_to_ptr.vmem [resolvable:$true] %s281
      %287 = dma.vmem_to_hbm [thread:$0]  %s282, 256, %s5, [#allocation3], 128, 128, 8
    $region25: #{feature_extractor.1} parent=1 // pred_fallthru
      _
    // Predicated region
    $region26: #{feature_extractor.1} parent=1 // pred_check
      _
    $region27: #{feature_extractor.1} parent=1 // pred_check_branch
      %289 = sbr.rel (0) target = $region29
    $region28: #{feature_extractor.1} parent=1 // pred_region
      %290 = dma.done [#allocation3], 256
    $region29: #{feature_extractor.1} parent=1 // pred_fallthru
      _
    %291 = vsyncpa [#allocation3], 1

</llo_original>
